<compile_context>
chip_gen: v5e
topology: v5e:2x2
jax: 0.10.0
libtpu: 0.0.40
codegen_flags: <defaults>
</compile_context>

<pallas_src>
import numpy as np
import jax
import jax.numpy as jnp
from jax.experimental import pallas as pl
from jax.experimental.pallas import tpu as pltpu


def make_kernel(k):
    k = np.asarray(k, dtype=np.float32)
    if k.ndim == 1:
        k = np.outer(k, k)
    k = k / k.sum()
    return k


def _cdiv(a, b):
    return -(-a // b)


def _round_up(a, b):
    return _cdiv(a, b) * b


def _padded_hw_bytes(h, w, itemsize):
    """Bytes of a (..., h, w) VMEM buffer after (sublane, 128-lane) tile padding."""
    sub = {4: 8, 2: 16, 1: 32}.get(itemsize, 8)
    return _round_up(h, sub) * _round_up(w, 128) * itemsize


def _vmem_budget_bytes():
    """Per-generation VMEM budget for all resident buffers (with headroom)."""
    try:
        info = pltpu.get_tpu_info()
        cap = int(getattr(info, "vmem_capacity_bytes", 0))
        if cap > 0:
            # ~75% of physical: ~48 MiB on v7x (64 MiB), ~96 MiB on v5e/v6e (128 MiB).
            return int(min(cap * 3 // 4, 100 << 20))
    except Exception:
        pass
    return 48 << 20  # safe on every generation (v7x physical VMEM is 64 MiB)


def _choose_channel_block(N, C, H, W, Hp, Wp, Ho, Wo, in_isz, out_isz, separable, budget):
    """Largest channel block whose *total* resident VMEM footprint fits the budget."""
    per_c = (2 * _padded_hw_bytes(H, W, in_isz)        # double-buffered input block
             + 2 * _padded_hw_bytes(Ho, Wo, out_isz)   # double-buffered output block
             + _padded_hw_bytes(Hp, Wp, in_isz))       # padded staging scratch
    if separable:
        per_c += _padded_hw_bytes(Hp, Wo, 4)           # f32 horizontal-pass scratch
    bc = max(1, min(C, budget // per_c))
    # v7x megacore: guarantee >= 2 grid steps on the "parallel" axes when possible.
    if N * _cdiv(C, bc) < 2 and C >= 2:
        bc = _cdiv(C, 2)
    return int(bc)


def _build_separable_kernel(ky_w, kx_w, BC, H, W, Hp, Wp, Ho, Wo, pad0, pad1,
                            stage_dtype, out_dtype):
    kh, kw = len(ky_w), len(kx_w)

    def kern(x_ref, o_ref, xpad_ref, hsum_ref):
        # x_ref: (1, BC, H, W)    o_ref: (1, BC, Ho, Wo)
        # xpad_ref: (BC, Hp, Wp)  hsum_ref: (BC, Hp, Wo) f32
        # Zero only the pad border strips; the interior is fully overwritten below.
        if pad0 > 0:
            xpad_ref[:, 0:pad0, :] = jnp.zeros((BC, pad0, Wp), stage_dtype)
            xpad_ref[:, :, 0:pad0] = jnp.zeros((BC, Hp, pad0), stage_dtype)
        if pad1 > 0:
            xpad_ref[:, pad0 + H:Hp, :] = jnp.zeros((BC, pad1, Wp), stage_dtype)
            xpad_ref[:, :, pad0 + W:Wp] = jnp.zeros((BC, Hp, pad1), stage_dtype)
        xpad_ref[:, pad0:pad0 + H, pad0:pad0 + W] = x_ref[0]
        # TODO(synk): the interior staging copy could also be removed by running the
        # horizontal taps straight off x_ref and special-casing the <= pad0+pad1
        # boundary columns/rows with shorter static tap sums.

        # Horizontal pass: taps shift along W (lane axis -> XLU rotates, idle slot).
        h = kx_w[0] * xpad_ref[:, :, 0:Wo].astype(jnp.float32)
        for kx in range(1, kw):
            h = h + kx_w[kx] * xpad_ref[:, :, kx:kx + Wo].astype(jnp.float32)
        hsum_ref[...] = h

        # Vertical pass: taps shift along H (sublane axis, cheap addressing).
        v = ky_w[0] * hsum_ref[:, 0:Ho, :]
        for ky in range(1, kh):
            v = v + ky_w[ky] * hsum_ref[:, ky:ky + Ho, :]
        o_ref[0] = v.astype(out_dtype)

    return kern


def _build_full_kernel(kflip, BC, H, W, Hp, Wp, Ho, Wo, pad0, pad1,
                       stage_dtype, out_dtype):
    kh, kw = kflip.shape
    taps = [[float(kflip[i, j]) for j in range(kw)] for i in range(kh)]

    def kern(x_ref, o_ref, xpad_ref):
        if pad0 > 0:
            xpad_ref[:, 0:pad0, :] = jnp.zeros((BC, pad0, Wp), stage_dtype)
            xpad_ref[:, :, 0:pad0] = jnp.zeros((BC, Hp, pad0), stage_dtype)
        if pad1 > 0:
            xpad_ref[:, pad0 + H:Hp, :] = jnp.zeros((BC, pad1, Wp), stage_dtype)
            xpad_ref[:, :, pad0 + W:Wp] = jnp.zeros((BC, Hp, pad1), stage_dtype)
        xpad_ref[:, pad0:pad0 + H, pad0:pad0 + W] = x_ref[0]
        acc = taps[0][0] * xpad_ref[:, 0:Ho, 0:Wo].astype(jnp.float32)
        for ky in range(kh):
            for kx in range(kw):
                if ky == 0 and kx == 0:
                    continue
                acc = acc + taps[ky][kx] * xpad_ref[:, ky:ky + Ho, kx:kx + Wo].astype(jnp.float32)
        o_ref[0] = acc.astype(out_dtype)
        # TODO(synk): for large non-separable taps, express each pass as a banded
        # (Wp x Wo) matmul so the MXU does the MACs instead of the VPU tap loop.

    return kern


def blur_upfirdn2d(x, kernel_2d, kernel_1d, scale, pad):
    """upfirdn2d with up=1, down=1, pad=(pad0, pad1): the StyleGAN2 Blur path (NCHW)."""
    N, C, H, W = x.shape
    kh, kw = kernel_2d.shape
    pad0, pad1 = pad
    assert pad0 >= 0 and pad1 >= 0, "Blur only uses non-negative padding"

    Hp, Wp = H + pad0 + pad1, W + pad0 + pad1
    Ho, Wo = Hp - kh + 1, Wp - kw + 1
    assert Ho >= 1 and Wo >= 1

    in_isz = jnp.dtype(x.dtype).itemsize
    separable = kernel_1d is not None
    budget = _vmem_budget_bytes()
    BC = _choose_channel_block(N, C, H, W, Hp, Wp, Ho, Wo, in_isz, in_isz,
                               separable, budget)
    n_cb = _cdiv(C, BC)
    stage_dtype = x.dtype  # keep HBM/VMEM traffic at input width; accumulate in f32

    scratch = [pltpu.VMEM((BC, Hp, Wp), stage_dtype)]
    if separable:
        # flip2d(outer(k1, k1) * scale) == outer(flip(k1), flip(k1) * scale)
        ky_w = tuple(float(v) for v in kernel_1d[::-1])
        kx_w = tuple(float(v) * scale for v in kernel_1d[::-1])
        kern = _build_separable_kernel(ky_w, kx_w, BC, H, W, Hp, Wp, Ho, Wo,
                                       pad0, pad1, stage_dtype, x.dtype)
        scratch.append(pltpu.VMEM((BC, Hp, Wo), jnp.float32))
    else:
        kern = _build_full_kernel(np.asarray(kernel_2d)[::-1, ::-1], BC, H, W, Hp, Wp,
                                  Ho, Wo, pad0, pad1, stage_dtype, x.dtype)

    # TODO(synk): for shapes where even BC=1 exceeds the VMEM budget (beyond the
    # largest 1024x1024 StyleGAN2 layers), add an H-strip grid axis with a halo.
    return pl.pallas_call(
        kern,
        out_shape=jax.ShapeDtypeStruct((N, C, Ho, Wo), x.dtype),
        grid_spec=pltpu.PrefetchScalarGridSpec(
            num_scalar_prefetch=0,
            grid=(N, n_cb),
            in_specs=[pl.BlockSpec((1, BC, H, W), lambda n, c: (n, c, 0, 0))],
            out_specs=pl.BlockSpec((1, BC, Ho, Wo), lambda n, c: (n, c, 0, 0)),
            scratch_shapes=scratch),
        compiler_params=pltpu.CompilerParams(
            dimension_semantics=("parallel", "parallel"),
            vmem_limit_bytes=int(budget)),
    )(x)


class Blur:
    """JAX/Pallas equivalent of the PyTorch StyleGAN2 Blur module (NCHW in/out)."""

    def __init__(self, kernel, pad, upsample_factor=1):
        k_raw = np.asarray(kernel, dtype=np.float32)
        self.kernel_1d = (k_raw / k_raw.sum()) if k_raw.ndim == 1 else None
        k2d = make_kernel(kernel)
        if upsample_factor > 1:
            k2d = k2d * (upsample_factor ** 2)
        self.kernel = k2d                       # registered-buffer equivalent (kh, kw)
        self.scale = float(k2d.sum())           # == upsample_factor**2 (or 1.0)
        self.pad = pad

    def __call__(self, x):
        return blur_upfirdn2d(x, self.kernel, self.kernel_1d, self.scale, self.pad)


if __name__ == "__main__":
    key = jax.random.PRNGKey(0)
    x = jax.random.normal(key, (2, 4, 16, 16), dtype=jnp.float32)
    N, C, H, W = x.shape

    # Two representative StyleGAN2 instantiations of Blur.
    configs = [
        dict(kernel=[1, 3, 3, 1], pad=(2, 2), upsample_factor=1),  # downsample-path blur
        dict(kernel=[1, 3, 3, 1], pad=(1, 1), upsample_factor=2),  # blur after transposed conv
    ]

    for cfg in configs:
        mod = Blur(cfg["kernel"], pad=cfg["pad"], upsample_factor=cfg["upsample_factor"])
        out = jax.block_until_ready(mod(x))

        # Reference: correlation with the flipped kernel on the zero-padded input,
        # identical to upfirdn2d(x, k, up=1, down=1, pad=pad).
        kflip = jnp.asarray(mod.kernel[::-1, ::-1])
        pad0, pad1 = mod.pad
        ref = jax.lax.conv_general_dilated(
            x.reshape(N * C, 1, H, W),
            kflip[None, None],
            window_strides=(1, 1),
            padding=[(pad0, pad1), (pad0, pad1)],
            dimension_numbers=("NCHW", "OIHW", "NCHW"),
        ).reshape(out.shape)

        np.testing.assert_allclose(np.asarray(out), np.asarray(ref), rtol=1e-5, atol=1e-5)

    print("KERNEL_OK")
</pallas_src>

<mosaic_0001>
module attributes {stable_mosaic.version = 11 : i64} {
  func.func @kern(%arg0: i32, %arg1: i32, %arg2: memref<1x4x16x16xf32, #tpu.memory_space<vmem>>, %arg3: memref<1x4x17x17xf32, #tpu.memory_space<vmem>>, %arg4: memref<4x20x20xf32, #tpu.memory_space<vmem>>, %arg5: memref<4x20x17xf32, #tpu.memory_space<vmem>>) attributes {dimension_semantics = [#tpu.dimension_semantics<parallel>, #tpu.dimension_semantics<parallel>], iteration_bounds = array<i64: 2, 1>, scalar_prefetch = 0 : i64, scratch_operands = 2 : i64, tpu.core_type = #tpu.core_type<tc>, window_params = [{transform_indices = @transform_0, window_bounds = array<i64: 1, 4, 16, 16>}, {transform_indices = @transform_1, window_bounds = array<i64: 1, 4, 17, 17>}]} {
    %cst = arith.constant 0.000000e+00 : f32
    %0 = vector.broadcast %cst : f32 to vector<4x2x20xf32>
    %c0 = arith.constant 0 : index
    %c0_0 = arith.constant 0 : index
    %c0_1 = arith.constant 0 : index
    %1 = vector.load %arg4[%c0, %c0_0, %c0_1] : memref<4x20x20xf32, #tpu.memory_space<vmem>>, vector<4x2x20xf32>
    tpu.vector_store %arg4[%c0, %c0_0, %c0_1], %0 {strides = array<i32>} : memref<4x20x20xf32, #tpu.memory_space<vmem>>, vector<4x2x20xf32>,
    %cst_2 = arith.constant 0.000000e+00 : f32
    %2 = vector.broadcast %cst_2 : f32 to vector<4x20x2xf32>
    %c0_3 = arith.constant 0 : index
    %c0_4 = arith.constant 0 : index
    %c0_5 = arith.constant 0 : index
    %3 = vector.load %arg4[%c0_3, %c0_4, %c0_5] : memref<4x20x20xf32, #tpu.memory_space<vmem>>, vector<4x20x2xf32>
    tpu.vector_store %arg4[%c0_3, %c0_4, %c0_5], %2 {strides = array<i32>} : memref<4x20x20xf32, #tpu.memory_space<vmem>>, vector<4x20x2xf32>,
    %cst_6 = arith.constant 0.000000e+00 : f32
    %4 = vector.broadcast %cst_6 : f32 to vector<4x2x20xf32>
    %c0_7 = arith.constant 0 : index
    %c18 = arith.constant 18 : index
    %c0_8 = arith.constant 0 : index
    %5 = vector.load %arg4[%c0_7, %c18, %c0_8] : memref<4x20x20xf32, #tpu.memory_space<vmem>>, vector<4x2x20xf32>
    tpu.vector_store %arg4[%c0_7, %c18, %c0_8], %4 {strides = array<i32>} : memref<4x20x20xf32, #tpu.memory_space<vmem>>, vector<4x2x20xf32>,
    %cst_9 = arith.constant 0.000000e+00 : f32
    %6 = vector.broadcast %cst_9 : f32 to vector<4x20x2xf32>
    %c0_10 = arith.constant 0 : index
    %c0_11 = arith.constant 0 : index
    %c18_12 = arith.constant 18 : index
    %7 = vector.load %arg4[%c0_10, %c0_11, %c18_12] : memref<4x20x20xf32, #tpu.memory_space<vmem>>, vector<4x20x2xf32>
    tpu.vector_store %arg4[%c0_10, %c0_11, %c18_12], %6 {strides = array<i32>} : memref<4x20x20xf32, #tpu.memory_space<vmem>>, vector<4x20x2xf32>,
    %c0_13 = arith.constant 0 : index
    %c0_14 = arith.constant 0 : index
    %c0_15 = arith.constant 0 : index
    %c0_16 = arith.constant 0 : index
    %8 = vector.load %arg2[%c0_13, %c0_14, %c0_15, %c0_16] : memref<1x4x16x16xf32, #tpu.memory_space<vmem>>, vector<1x4x16x16xf32>
    %9 = vector.shape_cast %8 : vector<1x4x16x16xf32> to vector<4x16x16xf32>
    %c0_17 = arith.constant 0 : index
    %c2 = arith.constant 2 : index
    %c2_18 = arith.constant 2 : index
    %10 = vector.load %arg4[%c0_17, %c2, %c2_18] : memref<4x20x20xf32, #tpu.memory_space<vmem>>, vector<4x16x16xf32>
    tpu.vector_store %arg4[%c0_17, %c2, %c2_18], %9 {strides = array<i32>} : memref<4x20x20xf32, #tpu.memory_space<vmem>>, vector<4x16x16xf32>,
    %c0_19 = arith.constant 0 : index
    %c0_20 = arith.constant 0 : index
    %c0_21 = arith.constant 0 : index
    %11 = vector.load %arg4[%c0_19, %c0_20, %c0_21] : memref<4x20x20xf32, #tpu.memory_space<vmem>>, vector<4x20x17xf32>
    %cst_22 = arith.constant 1.250000e-01 : f32
    %12 = vector.broadcast %cst_22 : f32 to vector<4x20x17xf32>
    %13 = arith.mulf %12, %11 : vector<4x20x17xf32>
    %c0_23 = arith.constant 0 : index
    %c0_24 = arith.constant 0 : index
    %c1 = arith.constant 1 : index
    %14 = vector.load %arg4[%c0_23, %c0_24, %c1] : memref<4x20x20xf32, #tpu.memory_space<vmem>>, vector<4x20x17xf32>
    %cst_25 = arith.constant 3.750000e-01 : f32
    %15 = vector.broadcast %cst_25 : f32 to vector<4x20x17xf32>
    %16 = arith.mulf %15, %14 : vector<4x20x17xf32>
    %17 = arith.addf %13, %16 : vector<4x20x17xf32>
    %c0_26 = arith.constant 0 : index
    %c0_27 = arith.constant 0 : index
    %c2_28 = arith.constant 2 : index
    %18 = vector.load %arg4[%c0_26, %c0_27, %c2_28] : memref<4x20x20xf32, #tpu.memory_space<vmem>>, vector<4x20x17xf32>
    %cst_29 = arith.constant 3.750000e-01 : f32
    %19 = vector.broadcast %cst_29 : f32 to vector<4x20x17xf32>
    %20 = arith.mulf %19, %18 : vector<4x20x17xf32>
    %21 = arith.addf %17, %20 : vector<4x20x17xf32>
    %c0_30 = arith.constant 0 : index
    %c0_31 = arith.constant 0 : index
    %c3 = arith.constant 3 : index
    %22 = vector.load %arg4[%c0_30, %c0_31, %c3] : memref<4x20x20xf32, #tpu.memory_space<vmem>>, vector<4x20x17xf32>
    %cst_32 = arith.constant 1.250000e-01 : f32
    %23 = vector.broadcast %cst_32 : f32 to vector<4x20x17xf32>
    %24 = arith.mulf %23, %22 : vector<4x20x17xf32>
    %25 = arith.addf %21, %24 : vector<4x20x17xf32>
    %c0_33 = arith.constant 0 : index
    %c0_34 = arith.constant 0 : index
    %c0_35 = arith.constant 0 : index
    %26 = vector.load %arg5[%c0_33, %c0_34, %c0_35] : memref<4x20x17xf32, #tpu.memory_space<vmem>>, vector<4x20x17xf32>
    tpu.vector_store %arg5[%c0_33, %c0_34, %c0_35], %25 {strides = array<i32>} : memref<4x20x17xf32, #tpu.memory_space<vmem>>, vector<4x20x17xf32>,
    %c0_36 = arith.constant 0 : index
    %c0_37 = arith.constant 0 : index
    %c0_38 = arith.constant 0 : index
    %27 = vector.load %arg5[%c0_36, %c0_37, %c0_38] : memref<4x20x17xf32, #tpu.memory_space<vmem>>, vector<4x17x17xf32>
    %cst_39 = arith.constant 1.250000e-01 : f32
    %28 = vector.broadcast %cst_39 : f32 to vector<4x17x17xf32>
    %29 = arith.mulf %28, %27 : vector<4x17x17xf32>
    %c0_40 = arith.constant 0 : index
    %c1_41 = arith.constant 1 : index
    %c0_42 = arith.constant 0 : index
    %30 = vector.load %arg5[%c0_40, %c1_41, %c0_42] : memref<4x20x17xf32, #tpu.memory_space<vmem>>, vector<4x17x17xf32>
    %cst_43 = arith.constant 3.750000e-01 : f32
    %31 = vector.broadcast %cst_43 : f32 to vector<4x17x17xf32>
    %32 = arith.mulf %31, %30 : vector<4x17x17xf32>
    %33 = arith.addf %29, %32 : vector<4x17x17xf32>
    %c0_44 = arith.constant 0 : index
    %c2_45 = arith.constant 2 : index
    %c0_46 = arith.constant 0 : index
    %34 = vector.load %arg5[%c0_44, %c2_45, %c0_46] : memref<4x20x17xf32, #tpu.memory_space<vmem>>, vector<4x17x17xf32>
    %cst_47 = arith.constant 3.750000e-01 : f32
    %35 = vector.broadcast %cst_47 : f32 to vector<4x17x17xf32>
    %36 = arith.mulf %35, %34 : vector<4x17x17xf32>
    %37 = arith.addf %33, %36 : vector<4x17x17xf32>
    %c0_48 = arith.constant 0 : index
    %c3_49 = arith.constant 3 : index
    %c0_50 = arith.constant 0 : index
    %38 = vector.load %arg5[%c0_48, %c3_49, %c0_50] : memref<4x20x17xf32, #tpu.memory_space<vmem>>, vector<4x17x17xf32>
    %cst_51 = arith.constant 1.250000e-01 : f32
    %39 = vector.broadcast %cst_51 : f32 to vector<4x17x17xf32>
    %40 = arith.mulf %39, %38 : vector<4x17x17xf32>
    %41 = arith.addf %37, %40 : vector<4x17x17xf32>
    %c0_52 = arith.constant 0 : index
    %c0_53 = arith.constant 0 : index
    %c0_54 = arith.constant 0 : index
    %c0_55 = arith.constant 0 : index
    %42 = vector.load %arg3[%c0_52, %c0_53, %c0_54, %c0_55] : memref<1x4x17x17xf32, #tpu.memory_space<vmem>>, vector<1x4x17x17xf32>
    %43 = vector.shape_cast %42 : vector<1x4x17x17xf32> to vector<4x17x17xf32>
    %44 = vector.shape_cast %41 : vector<4x17x17xf32> to vector<1x4x17x17xf32>
    tpu.vector_store %arg3[%c0_52, %c0_53, %c0_54, %c0_55], %44 {strides = array<i32>} : memref<1x4x17x17xf32, #tpu.memory_space<vmem>>, vector<1x4x17x17xf32>,
    return
  }
  func.func @transform_0(%arg0: i32, %arg1: i32) -> (i32, i32, i32, i32) {
    %c0_i32 = arith.constant 0 : i32
    %c0_i32_0 = arith.constant 0 : i32
    %c0_i32_1 = arith.constant 0 : i32
    return %arg0, %arg1, %c0_i32, %c0_i32_0 : i32, i32, i32, i32
  }
  func.func @transform_1(%arg0: i32, %arg1: i32) -> (i32, i32, i32, i32) {
    %c0_i32 = arith.constant 0 : i32
    %c0_i32_0 = arith.constant 0 : i32
    %c0_i32_1 = arith.constant 0 : i32
    return %arg0, %arg1, %c0_i32, %c0_i32_0 : i32, i32, i32, i32
  }
}

</mosaic_0001>

<llo_original>
// kernel: tpu_custom_call.1
$region0: #{tpu_custom_call.1}
  #allocation0 [shape = 'u32[]', space=smem, size = 0x4, offset = 0x4, fixed_abs, tag = 'smem constant byte address 0x4 - core index']
  #allocation1 [shape = 'u32[72,128]{1,0:T(1,128)}', space=vmem, size = 0x9000, scoped, tag = 'internal scratch']
  #allocation2 [shape = 'f32[4,20,20]{2,1,0:T(8,128)}', space=vmem, size = 0xc000, scoped, tag = 'scratch operand']
  #allocation3 [shape = 'f32[4,20,17]{2,1,0:T(8,128)}', space=vmem, size = 0xc000, scoped, tag = 'scratch operand']
  %s0 = inlined_call_operand.hbm [shape: f32[2,4,16,16], index: 0, kind: input, shape index: {}]
  %s1 = inlined_call_operand.vmem [shape: f32[2,4,17,17], index: 1, kind: output, shape index: {}]
  %s2 = sld [smem:[#allocation0]]
  $region41: #{tpu_custom_call.1} parent=0
    _
  %s4 = ssub.s32 1, %s2
  %s5 = scalar_select 0, %s4, %s2
  $region1: #{tpu_custom_call.1} parent=0
    #allocation4 [shape = 'u8[65536]{0}', space=vmem, size = 0x10000, scoped, tag = 'input window, operand 0']
    #allocation5 [shape = 's32[2]{0}', space=sflag, size = 0x8, scoped, tag = 'scoped memory for tpu_custom_call.1']
    %6 = vsyncpa [#allocation5], 0
    %s7 = scalar_lea.sflag [#allocation5], 1
    %8 = vsyncpa %s7, 0
    loop: start=0, step=1, limit=4
    $region2: #{tpu_custom_call.1} parent=1 // loop_pre_header
      _
    $region3: #{tpu_custom_call.1} parent=1 // loop_header
      %s10 = sphi 0, %s14
      %p11 = scmp.ge.s32.totalorder %s10, 4
      %s17 = sphi 0, %s29
      %s18 = sphi 0, %s25
      %s19 = sphi 0, %s17
      %s20 = sphi 0, %s18
      %s21 = sphi 0, %s19
      %s22 = sphi 0, %s20
      %s34 = sphi 0, %s36
      %s37 = sphi 0, %s34
      %s38 = sphi 0, %s37
      %s54 = sphi 0, %s38
      %s62 = sphi 0, %s64
      %s65 = sphi 0, %s62
      %s66 = sphi 0, %s65
      %s82 = sphi 0, %s66
    $region4: #{tpu_custom_call.1} parent=1 // loop_header_branch
      %13 = sbr.rel (%p11) target = $region8
    $region5: #{tpu_custom_call.1} parent=1 // loop_body
      %s15 = ssub.s32 %s10, 1
      %s16 = ssub.s32 %s10, 2
      %s23 = sadd.s32 1, %s18
      %p24 = scmp.ge.s32.totalorder %s23, 1
      %s25 = scalar_select %p24, 0, %s23
      %s26 = sadd.s32 1, %s17
      %s27 = scalar_select %p24, %s26, %s17
      %p28 = scmp.ge.s32.totalorder %s27, 2
      %s29 = scalar_select %p28, 0, %s27
      %s30 = ssub.s32 %s17, %s29
      %s31 = ssub.s32 %s18, %s25
      %s32 = sor.u32 %s30, %s31
      %p33 = scmp.eq.s32.totalorder %s32, 0
      %s35 = sadd.s32 %s34, 1
      %s36 = scalar_select %p33, %s34, %s35
      %p39 = pneg %p33
      %p40 = scmp.eq.s32.totalorder %s10, 1
      %p41 = por %p39, %p40
      %p42 = scmp.ne.s32.totalorder %s34, %s37
      %p43 = scmp.eq.s32.totalorder %s10, 0
      %p44 = por %p42, %p43
      %p45 = scmp.ne.s32.totalorder %s34, %s37
      %p46 = scmp.eq.s32.totalorder %s15, 1
      %p47 = por %p45, %p46
      %p48 = scmp.ne.s32.totalorder %s37, %s38
      %p49 = scmp.eq.s32.totalorder %s15, 0
      %p50 = por %p48, %p49
      %p51 = scmp.ne.s32.totalorder %s37, %s38
      %p52 = scmp.eq.s32.totalorder %s16, 1
      %p53 = por %p51, %p52
      %p55 = scmp.ne.s32.totalorder %s38, %s54
      %p56 = scmp.eq.s32.totalorder %s16, 0
      %p57 = por %p55, %p56
      %s58 = ssub.s32 %s17, %s29
      %s59 = ssub.s32 %s18, %s25
      %s60 = sor.u32 %s58, %s59
      %p61 = scmp.eq.s32.totalorder %s60, 0
      %s63 = sadd.s32 %s62, 1
      %s64 = scalar_select %p61, %s62, %s63
      %p67 = pneg %p61
      %p68 = scmp.eq.s32.totalorder %s10, 1
      %p69 = por %p67, %p68
      %p70 = scmp.ne.s32.totalorder %s62, %s65
      %p71 = scmp.eq.s32.totalorder %s10, 0
      %p72 = por %p70, %p71
      %p73 = scmp.ne.s32.totalorder %s62, %s65
      %p74 = scmp.eq.s32.totalorder %s15, 1
      %p75 = por %p73, %p74
      %p76 = scmp.ne.s32.totalorder %s65, %s66
      %p77 = scmp.eq.s32.totalorder %s15, 0
      %p78 = por %p76, %p77
      %p79 = scmp.ne.s32.totalorder %s65, %s66
      %p80 = scmp.eq.s32.totalorder %s16, 1
      %p81 = por %p79, %p80
      %p83 = scmp.ne.s32.totalorder %s66, %s82
      %p84 = scmp.eq.s32.totalorder %s16, 0
      %p85 = por %p83, %p84
      %p86 = scmp.le.s32.totalorder 1, %s10
      %p87 = scmp.lt.s32.totalorder %s10, 3
      %p88 = pnand %p86, %p87
      %p89 = pneg %p88
      // Predicated region
      $region9: #{tpu_custom_call.1} parent=5 // pred_check
        _
      $region10: #{tpu_custom_call.1} parent=5 // pred_check_branch
        %91 = sbr.rel (%p88) target = $region12
      $region11: #{tpu_custom_call.1} parent=5 // pred_region
        %s92 = ssub.s32 %s10, 1
      $region12: #{tpu_custom_call.1} parent=5 // pred_fallthru
        _
      %p93 = scmp.lt.s32.totalorder %s10, 2
      // Predicated region
      $region13: #{tpu_custom_call.1} parent=5 // pred_check
        %p94 = pneg %p93
      $region14: #{tpu_custom_call.1} parent=5 // pred_check_branch
        %96 = sbr.rel (%p94) target = $region16
      $region15: #{tpu_custom_call.1} parent=5 // pred_region
        // Predicated region
        $region17: #{tpu_custom_call.1} parent=15 // pred_check
          %p97 = pneg %p44
        $region18: #{tpu_custom_call.1} parent=15 // pred_check_branch
          %99 = sbr.rel (%p97) target = $region20
        $region19: #{tpu_custom_call.1} parent=15 // pred_region
          %s100 = sand.u32 %s34, 1
          %s101 = scalar_lea.sflag [#allocation5], %s100
          %s102 = sand.u32 %s34, 1
          %s103 = smul.addr %s102, 64
          %s104 = scalar_lea.vmem [#allocation4], %s103
          %s105 = smul.u32 4, %s18
          %107 = vsyncadd %s101, 0
          %s108 = smul.addr %s105, 2
          %s109 = smul.addr %s17, 8
          %s110 = sadd.s32 %s108, %s109
          %s111 = smul.addr %s110, 8
          %s112 = scalar_lea.hbm %s0, %s111
          %s113 = sshll.u32 %s112, 4
          %s114 = int_to_ptr.hbm [resolvable:$true] %s113
          %s115 = sshll.u32 %s104, 4
          %s116 = int_to_ptr.vmem [resolvable:$true] %s115
          %121 = dma.hbm_to_vmem [thread:$0]  %s114, 1024, %s116, %s101, 128, 128, 8
        $region20: #{tpu_custom_call.1} parent=15 // pred_fallthru
          _
      $region16: #{tpu_custom_call.1} parent=5 // pred_fallthru
        _
      %p122 = scmp.le.s32.totalorder 1, %s10
      %p123 = scmp.lt.s32.totalorder %s10, 3
      %p124 = pnand %p122, %p123
      %p125 = pneg %p124
      // Predicated region
      $region21: #{tpu_custom_call.1} parent=5 // pred_check
        _
      $region22: #{tpu_custom_call.1} parent=5 // pred_check_branch
        %127 = sbr.rel (%p124) target = $region24
      $region23: #{tpu_custom_call.1} parent=5 // pred_region
        %s128 = ssub.s32 %s10, 1
        %s129 = sand.u32 %s37, 1
        %s130 = scalar_lea.sflag [#allocation5], %s129
        %s131 = sand.u32 %s37, 1
        %s132 = smul.addr %s131, 64
        %s133 = scalar_lea.vmem [#allocation4], %s132
        // Predicated region
        $region25: #{tpu_custom_call.1} parent=23 // pred_check
          %p134 = pneg %p50
        $region26: #{tpu_custom_call.1} parent=23 // pred_check_branch
          %136 = sbr.rel (%p134) target = $region28
        $region27: #{tpu_custom_call.1} parent=23 // pred_region
          %138 = dma.done %s130, 1024
        $region28: #{tpu_custom_call.1} parent=23 // pred_fallthru
          _
        %s139 = sand.u32 %s37, 1
        %s140 = scalar_lea.sflag [#allocation5], %s139
        %s141 = sand.u32 %s37, 1
        %s142 = smul.addr %s141, 64
        %s143 = scalar_lea.vmem [#allocation4], %s142
        %p144 = pneg %p50
        %p145 = pneg %p47
        %p146 = pneg %p78
        %p147 = pneg %p75
        %s148 = smul.u32 4, %s20
        %p149 = scmp.lt.s32.totalorder %s19, 1
        %s150 = scalar_select %p149, %s19, 1
        %p151 = scmp.lt.s32.totalorder %s148, 3
        %s152 = scalar_select %p151, %s148, 3
        %s153 = smul.addr %s152, 3
        %s154 = smul.addr %s150, 12
        %s155 = sadd.s32 %s153, %s154
        %s156 = smul.addr %s155, 8
        %s157 = scalar_lea.vmem %s1, %s156
        %s158 = smul.u32 4, %s20
        %s159 = smul.u32 4, %s20
        %p160 = scmp.lt.s32.totalorder %s19, 1
        %s161 = scalar_select %p160, %s19, 1
        %p162 = scmp.lt.s32.totalorder %s159, 3
        %s163 = scalar_select %p162, %s159, 3
        %s164 = smul.addr %s163, 3
        %s165 = smul.addr %s161, 12
        %s166 = sadd.s32 %s164, %s165
        %s167 = smul.addr %s166, 8
        %s168 = scalar_lea.vmem %s1, %s167
        %s169 = smul.u32 4, %s20
        %vm170 = vcmask 156672
        %171 = vst.msk [vmem:[#allocation2] sm:$0x3] %vm170, 0.0
        %172 = vst.msk [vmem:[#allocation2 + $0x18] sm:$0x3] %vm170, 0.0
        %173 = vst.msk [vmem:[#allocation2 + $0x30] sm:$0x3] %vm170, 0.0
        %174 = vst.msk [vmem:[#allocation2 + $0x48] sm:$0x3] %vm170, 0.0
        %vm175 = vcmask 15360
        %176 = vst.msk [vmem:[#allocation2] sm:$0xff] %vm175, 0.0
        %177 = vst.msk [vmem:[#allocation2 + $0x8] sm:$0xff] %vm175, 0.0
        %vm178 = vcmask 11264
        %179 = vst.msk [vmem:[#allocation2 + $0x10] sm:$0xf] %vm178, 0.0
        %180 = vst.msk [vmem:[#allocation2 + $0x18] sm:$0xff] %vm175, 0.0
        %181 = vst.msk [vmem:[#allocation2 + $0x20] sm:$0xff] %vm175, 0.0
        %182 = vst.msk [vmem:[#allocation2 + $0x28] sm:$0xf] %vm178, 0.0
        %183 = vst.msk [vmem:[#allocation2 + $0x30] sm:$0xff] %vm175, 0.0
        %184 = vst.msk [vmem:[#allocation2 + $0x38] sm:$0xff] %vm175, 0.0
        %185 = vst.msk [vmem:[#allocation2 + $0x40] sm:$0xf] %vm178, 0.0
        %186 = vst.msk [vmem:[#allocation2 + $0x48] sm:$0xff] %vm175, 0.0
        %187 = vst.msk [vmem:[#allocation2 + $0x50] sm:$0xff] %vm175, 0.0
        %188 = vst.msk [vmem:[#allocation2 + $0x58] sm:$0xf] %vm178, 0.0
        %189 = vst.msk [vmem:[#allocation2 + $0x12] sm:$0x3] %vm170, 0.0
        %190 = vst.msk [vmem:[#allocation2 + $0x2a] sm:$0x3] %vm170, 0.0
        %191 = vst.msk [vmem:[#allocation2 + $0x42] sm:$0x3] %vm170, 0.0
        %192 = vst.msk [vmem:[#allocation2 + $0x5a] sm:$0x3] %vm170, 0.0
        %vm193 = vcmask 162960
        %194 = vst.msk [vmem:[#allocation2] sm:$0xff] %vm193, 0.0
        %195 = vst.msk [vmem:[#allocation2 + $0x8] sm:$0xff] %vm193, 0.0
        %vm196 = vcmask 158864
        %197 = vst.msk [vmem:[#allocation2 + $0x10] sm:$0xf] %vm196, 0.0
        %198 = vst.msk [vmem:[#allocation2 + $0x18] sm:$0xff] %vm193, 0.0
        %199 = vst.msk [vmem:[#allocation2 + $0x20] sm:$0xff] %vm193, 0.0
        %200 = vst.msk [vmem:[#allocation2 + $0x28] sm:$0xf] %vm196, 0.0
        %201 = vst.msk [vmem:[#allocation2 + $0x30] sm:$0xff] %vm193, 0.0
        %202 = vst.msk [vmem:[#allocation2 + $0x38] sm:$0xff] %vm193, 0.0
        %203 = vst.msk [vmem:[#allocation2 + $0x40] sm:$0xf] %vm196, 0.0
        %204 = vst.msk [vmem:[#allocation2 + $0x48] sm:$0xff] %vm193, 0.0
        %205 = vst.msk [vmem:[#allocation2 + $0x50] sm:$0xff] %vm193, 0.0
        %206 = vst.msk [vmem:[#allocation2 + $0x58] sm:$0xf] %vm196, 0.0
        %v207 = vld [vmem:[%s133] sm:$0xff]
        %v208 = vld [vmem:[%s133 + $0x8] sm:$0xff]
        %v209 = vld [vmem:[%s133 + $0x10] sm:$0xff]
        %v210 = vld [vmem:[%s133 + $0x18] sm:$0xff]
        %v211 = vld [vmem:[%s133 + $0x20] sm:$0xff]
        %v212 = vld [vmem:[%s133 + $0x28] sm:$0xff]
        %v213 = vld [vmem:[%s133 + $0x30] sm:$0xff]
        %v214 = vld [vmem:[%s133 + $0x38] sm:$0xff]
        %223 = vrot.lane.b32.xlu0 %v207, 2
        %v224 = vpop.permute.xlu0 %223
        %225 = vrot.lane.b32.xlu0 %v208, 2
        %v226 = vpop.permute.xlu0 %225
        %227 = vrot.lane.b32.xlu0 %v209, 2
        %v228 = vpop.permute.xlu0 %227
        %229 = vrot.lane.b32.xlu0 %v210, 2
        %v230 = vpop.permute.xlu0 %229
        %231 = vrot.lane.b32.xlu0 %v211, 2
        %v232 = vpop.permute.xlu0 %231
        %233 = vrot.lane.b32.xlu0 %v212, 2
        %v234 = vpop.permute.xlu0 %233
        %235 = vrot.lane.b32.xlu0 %v213, 2
        %v236 = vpop.permute.xlu0 %235
        %237 = vrot.lane.b32.xlu0 %v214, 2
        %v238 = vpop.permute.xlu0 %237
        %vm247 = vcmask 146448
        %248 = vst.msk [vmem:[#allocation2 + $0x2] sm:$0xff] %vm247, %v224
        %249 = vst.msk [vmem:[#allocation2 + $0xa] sm:$0xff] %vm247, %v226
        %250 = vst.msk [vmem:[#allocation2 + $0x1a] sm:$0xff] %vm247, %v228
        %251 = vst.msk [vmem:[#allocation2 + $0x22] sm:$0xff] %vm247, %v230
        %252 = vst.msk [vmem:[#allocation2 + $0x32] sm:$0xff] %vm247, %v232
        %253 = vst.msk [vmem:[#allocation2 + $0x3a] sm:$0xff] %vm247, %v234
        %254 = vst.msk [vmem:[#allocation2 + $0x4a] sm:$0xff] %vm247, %v236
        %255 = vst.msk [vmem:[#allocation2 + $0x52] sm:$0xff] %vm247, %v238
        %v256 = vld [vmem:[#allocation2] sm:$0xff]
        %v257 = vld [vmem:[#allocation2 + $0x8] sm:$0xff]
        %v258 = vld [vmem:[#allocation2 + $0x10] sm:$0xf]
        %v259 = vld [vmem:[#allocation2 + $0x18] sm:$0xff]
        %v260 = vld [vmem:[#allocation2 + $0x20] sm:$0xff]
        %v261 = vld [vmem:[#allocation2 + $0x28] sm:$0xf]
        %v262 = vld [vmem:[#allocation2 + $0x30] sm:$0xff]
        %v263 = vld [vmem:[#allocation2 + $0x38] sm:$0xff]
        %v264 = vld [vmem:[#allocation2 + $0x40] sm:$0xf]
        %v265 = vld [vmem:[#allocation2 + $0x48] sm:$0xff]
        %v266 = vld [vmem:[#allocation2 + $0x50] sm:$0xff]
        %v267 = vld [vmem:[#allocation2 + $0x58] sm:$0xf]
        %v268 = vmul.f32 %v256, 0.125
        %v269 = vmul.f32 %v257, 0.125
        %v270 = vmul.f32 %v258, 0.125
        %v271 = vmul.f32 %v259, 0.125
        %v272 = vmul.f32 %v260, 0.125
        %v273 = vmul.f32 %v261, 0.125
        %v274 = vmul.f32 %v262, 0.125
        %v275 = vmul.f32 %v263, 0.125
        %v276 = vmul.f32 %v264, 0.125
        %v277 = vmul.f32 %v265, 0.125
        %v278 = vmul.f32 %v266, 0.125
        %v279 = vmul.f32 %v267, 0.125
        %v280 = vmul.f32 %v256, 0.375
        %v281 = vmul.f32 %v257, 0.375
        %v282 = vmul.f32 %v258, 0.375
        %v283 = vmul.f32 %v259, 0.375
        %v284 = vmul.f32 %v260, 0.375
        %v285 = vmul.f32 %v261, 0.375
        %v286 = vmul.f32 %v262, 0.375
        %v287 = vmul.f32 %v263, 0.375
        %v288 = vmul.f32 %v264, 0.375
        %v289 = vmul.f32 %v265, 0.375
        %v290 = vmul.f32 %v266, 0.375
        %v291 = vmul.f32 %v267, 0.375
        %304 = vrot.lane.b32.xlu0 %v280, 127
        %v305 = vpop.permute.xlu0 %304
        %306 = vrot.lane.b32.xlu0 %v281, 127
        %v307 = vpop.permute.xlu0 %306
        %308 = vrot.lane.b32.xlu0 %v282, 127
        %v309 = vpop.permute.xlu0 %308
        %310 = vrot.lane.b32.xlu0 %v283, 127
        %v311 = vpop.permute.xlu0 %310
        %312 = vrot.lane.b32.xlu0 %v284, 127
        %v313 = vpop.permute.xlu0 %312
        %314 = vrot.lane.b32.xlu0 %v285, 127
        %v315 = vpop.permute.xlu0 %314
        %316 = vrot.lane.b32.xlu0 %v286, 127
        %v317 = vpop.permute.xlu0 %316
        %318 = vrot.lane.b32.xlu0 %v287, 127
        %v319 = vpop.permute.xlu0 %318
        %320 = vrot.lane.b32.xlu0 %v288, 127
        %v321 = vpop.permute.xlu0 %320
        %322 = vrot.lane.b32.xlu0 %v289, 127
        %v323 = vpop.permute.xlu0 %322
        %324 = vrot.lane.b32.xlu0 %v290, 127
        %v325 = vpop.permute.xlu0 %324
        %326 = vrot.lane.b32.xlu0 %v291, 127
        %v327 = vpop.permute.xlu0 %326
        %v340 = vadd.f32 %v268, %v305
        %v341 = vadd.f32 %v269, %v307
        %v342 = vadd.f32 %v270, %v309
        %v343 = vadd.f32 %v271, %v311
        %v344 = vadd.f32 %v272, %v313
        %v345 = vadd.f32 %v273, %v315
        %v346 = vadd.f32 %v274, %v317
        %v347 = vadd.f32 %v275, %v319
        %v348 = vadd.f32 %v276, %v321
        %v349 = vadd.f32 %v277, %v323
        %v350 = vadd.f32 %v278, %v325
        %v351 = vadd.f32 %v279, %v327
        %352 = vrot.lane.b32.xlu0 %v280, 126
        %v353 = vpop.permute.xlu0 %352
        %354 = vrot.lane.b32.xlu0 %v281, 126
        %v355 = vpop.permute.xlu0 %354
        %356 = vrot.lane.b32.xlu0 %v282, 126
        %v357 = vpop.permute.xlu0 %356
        %358 = vrot.lane.b32.xlu0 %v283, 126
        %v359 = vpop.permute.xlu0 %358
        %360 = vrot.lane.b32.xlu0 %v284, 126
        %v361 = vpop.permute.xlu0 %360
        %362 = vrot.lane.b32.xlu0 %v285, 126
        %v363 = vpop.permute.xlu0 %362
        %364 = vrot.lane.b32.xlu0 %v286, 126
        %v365 = vpop.permute.xlu0 %364
        %366 = vrot.lane.b32.xlu0 %v287, 126
        %v367 = vpop.permute.xlu0 %366
        %368 = vrot.lane.b32.xlu0 %v288, 126
        %v369 = vpop.permute.xlu0 %368
        %370 = vrot.lane.b32.xlu0 %v289, 126
        %v371 = vpop.permute.xlu0 %370
        %372 = vrot.lane.b32.xlu0 %v290, 126
        %v373 = vpop.permute.xlu0 %372
        %374 = vrot.lane.b32.xlu0 %v291, 126
        %v375 = vpop.permute.xlu0 %374
        %v388 = vadd.f32 %v340, %v353
        %v389 = vadd.f32 %v341, %v355
        %v390 = vadd.f32 %v342, %v357
        %v391 = vadd.f32 %v343, %v359
        %v392 = vadd.f32 %v344, %v361
        %v393 = vadd.f32 %v345, %v363
        %v394 = vadd.f32 %v346, %v365
        %v395 = vadd.f32 %v347, %v367
        %v396 = vadd.f32 %v348, %v369
        %v397 = vadd.f32 %v349, %v371
        %v398 = vadd.f32 %v350, %v373
        %v399 = vadd.f32 %v351, %v375
        %412 = vrot.lane.b32.xlu0 %v268, 125
        %v413 = vpop.permute.xlu0 %412
        %414 = vrot.lane.b32.xlu0 %v269, 125
        %v415 = vpop.permute.xlu0 %414
        %416 = vrot.lane.b32.xlu0 %v270, 125
        %v417 = vpop.permute.xlu0 %416
        %418 = vrot.lane.b32.xlu0 %v271, 125
        %v419 = vpop.permute.xlu0 %418
        %420 = vrot.lane.b32.xlu0 %v272, 125
        %v421 = vpop.permute.xlu0 %420
        %422 = vrot.lane.b32.xlu0 %v273, 125
        %v423 = vpop.permute.xlu0 %422
        %424 = vrot.lane.b32.xlu0 %v274, 125
        %v425 = vpop.permute.xlu0 %424
        %426 = vrot.lane.b32.xlu0 %v275, 125
        %v427 = vpop.permute.xlu0 %426
        %428 = vrot.lane.b32.xlu0 %v276, 125
        %v429 = vpop.permute.xlu0 %428
        %430 = vrot.lane.b32.xlu0 %v277, 125
        %v431 = vpop.permute.xlu0 %430
        %432 = vrot.lane.b32.xlu0 %v278, 125
        %v433 = vpop.permute.xlu0 %432
        %434 = vrot.lane.b32.xlu0 %v279, 125
        %v435 = vpop.permute.xlu0 %434
        %v448 = vadd.f32 %v388, %v413
        %v449 = vadd.f32 %v389, %v415
        %v450 = vadd.f32 %v390, %v417
        %v451 = vadd.f32 %v391, %v419
        %v452 = vadd.f32 %v392, %v421
        %v453 = vadd.f32 %v393, %v423
        %v454 = vadd.f32 %v394, %v425
        %v455 = vadd.f32 %v395, %v427
        %v456 = vadd.f32 %v396, %v429
        %v457 = vadd.f32 %v397, %v431
        %v458 = vadd.f32 %v398, %v433
        %v459 = vadd.f32 %v399, %v435
        %vm460 = vcmask 138240
        %461 = vst.msk [vmem:[#allocation3] sm:$0xff] %vm460, %v448
        %462 = vst.msk [vmem:[#allocation3 + $0x8] sm:$0xff] %vm460, %v449
        %vm463 = vcmask 134144
        %464 = vst.msk [vmem:[#allocation3 + $0x10] sm:$0xf] %vm463, %v450
        %465 = vst.msk [vmem:[#allocation3 + $0x18] sm:$0xff] %vm460, %v451
        %466 = vst.msk [vmem:[#allocation3 + $0x20] sm:$0xff] %vm460, %v452
        %467 = vst.msk [vmem:[#allocation3 + $0x28] sm:$0xf] %vm463, %v453
        %468 = vst.msk [vmem:[#allocation3 + $0x30] sm:$0xff] %vm460, %v454
        %469 = vst.msk [vmem:[#allocation3 + $0x38] sm:$0xff] %vm460, %v455
        %470 = vst.msk [vmem:[#allocation3 + $0x40] sm:$0xf] %vm463, %v456
        %471 = vst.msk [vmem:[#allocation3 + $0x48] sm:$0xff] %vm460, %v457
        %472 = vst.msk [vmem:[#allocation3 + $0x50] sm:$0xff] %vm460, %v458
        %473 = vst.msk [vmem:[#allocation3 + $0x58] sm:$0xf] %vm463, %v459
        %v474 = vld [vmem:[#allocation3] sm:$0xff]
        %v475 = vld [vmem:[#allocation3 + $0x8] sm:$0xff]
        %v476 = vld [vmem:[#allocation3 + $0x10] sm:$0x1]
        %v477 = vld [vmem:[#allocation3 + $0x18] sm:$0xff]
        %v478 = vld [vmem:[#allocation3 + $0x20] sm:$0xff]
        %v479 = vld [vmem:[#allocation3 + $0x28] sm:$0x1]
        %v480 = vld [vmem:[#allocation3 + $0x30] sm:$0xff]
        %v481 = vld [vmem:[#allocation3 + $0x38] sm:$0xff]
        %v482 = vld [vmem:[#allocation3 + $0x40] sm:$0x1]
        %v483 = vld [vmem:[#allocation3 + $0x48] sm:$0xff]
        %v484 = vld [vmem:[#allocation3 + $0x50] sm:$0xff]
        %v485 = vld [vmem:[#allocation3 + $0x58] sm:$0x1]
        %v486 = vmul.f32 %v474, 0.125
        %v487 = vmul.f32 %v475, 0.125
        %v488 = vmul.f32 %v476, 0.125
        %v489 = vmul.f32 %v477, 0.125
        %v490 = vmul.f32 %v478, 0.125
        %v491 = vmul.f32 %v479, 0.125
        %v492 = vmul.f32 %v480, 0.125
        %v493 = vmul.f32 %v481, 0.125
        %v494 = vmul.f32 %v482, 0.125
        %v495 = vmul.f32 %v483, 0.125
        %v496 = vmul.f32 %v484, 0.125
        %v497 = vmul.f32 %v485, 0.125
        %v498 = vld [vmem:[#allocation3 + $0x1] sm:$0xff]
        %v499 = vld [vmem:[#allocation3 + $0x9] sm:$0xff]
        %v500 = vld [vmem:[#allocation3 + $0x11] sm:$0x1]
        %v501 = vld [vmem:[#allocation3 + $0x19] sm:$0xff]
        %v502 = vld [vmem:[#allocation3 + $0x21] sm:$0xff]
        %v503 = vld [vmem:[#allocation3 + $0x29] sm:$0x1]
        %v504 = vld [vmem:[#allocation3 + $0x31] sm:$0xff]
        %v505 = vld [vmem:[#allocation3 + $0x39] sm:$0xff]
        %v506 = vld [vmem:[#allocation3 + $0x41] sm:$0x1]
        %v507 = vld [vmem:[#allocation3 + $0x49] sm:$0xff]
        %v508 = vld [vmem:[#allocation3 + $0x51] sm:$0xff]
        %v509 = vld [vmem:[#allocation3 + $0x59] sm:$0x1]
        %v510 = vmul.f32 %v498, 0.375
        %v511 = vmul.f32 %v499, 0.375
        %v512 = vmul.f32 %v500, 0.375
        %v513 = vmul.f32 %v501, 0.375
        %v514 = vmul.f32 %v502, 0.375
        %v515 = vmul.f32 %v503, 0.375
        %v516 = vmul.f32 %v504, 0.375
        %v517 = vmul.f32 %v505, 0.375
        %v518 = vmul.f32 %v506, 0.375
        %v519 = vmul.f32 %v507, 0.375
        %v520 = vmul.f32 %v508, 0.375
        %v521 = vmul.f32 %v509, 0.375
        %v522 = vadd.f32 %v486, %v510
        %v523 = vadd.f32 %v487, %v511
        %v524 = vadd.f32 %v488, %v512
        %v525 = vadd.f32 %v489, %v513
        %v526 = vadd.f32 %v490, %v514
        %v527 = vadd.f32 %v491, %v515
        %v528 = vadd.f32 %v492, %v516
        %v529 = vadd.f32 %v493, %v517
        %v530 = vadd.f32 %v494, %v518
        %v531 = vadd.f32 %v495, %v519
        %v532 = vadd.f32 %v496, %v520
        %v533 = vadd.f32 %v497, %v521
        %v534 = vld [vmem:[#allocation3 + $0x2] sm:$0xff]
        %v535 = vld [vmem:[#allocation3 + $0xa] sm:$0xff]
        %v536 = vld [vmem:[#allocation3 + $0x12] sm:$0x1]
        %v537 = vld [vmem:[#allocation3 + $0x1a] sm:$0xff]
        %v538 = vld [vmem:[#allocation3 + $0x22] sm:$0xff]
        %v539 = vld [vmem:[#allocation3 + $0x2a] sm:$0x1]
        %v540 = vld [vmem:[#allocation3 + $0x32] sm:$0xff]
        %v541 = vld [vmem:[#allocation3 + $0x3a] sm:$0xff]
        %v542 = vld [vmem:[#allocation3 + $0x42] sm:$0x1]
        %v543 = vld [vmem:[#allocation3 + $0x4a] sm:$0xff]
        %v544 = vld [vmem:[#allocation3 + $0x52] sm:$0xff]
        %v545 = vld [vmem:[#allocation3 + $0x5a] sm:$0x1]
        %v546 = vmul.f32 %v534, 0.375
        %v547 = vmul.f32 %v535, 0.375
        %v548 = vmul.f32 %v536, 0.375
        %v549 = vmul.f32 %v537, 0.375
        %v550 = vmul.f32 %v538, 0.375
        %v551 = vmul.f32 %v539, 0.375
        %v552 = vmul.f32 %v540, 0.375
        %v553 = vmul.f32 %v541, 0.375
        %v554 = vmul.f32 %v542, 0.375
        %v555 = vmul.f32 %v543, 0.375
        %v556 = vmul.f32 %v544, 0.375
        %v557 = vmul.f32 %v545, 0.375
        %v558 = vadd.f32 %v522, %v546
        %v559 = vadd.f32 %v523, %v547
        %v560 = vadd.f32 %v524, %v548
        %v561 = vadd.f32 %v525, %v549
        %v562 = vadd.f32 %v526, %v550
        %v563 = vadd.f32 %v527, %v551
        %v564 = vadd.f32 %v528, %v552
        %v565 = vadd.f32 %v529, %v553
        %v566 = vadd.f32 %v530, %v554
        %v567 = vadd.f32 %v531, %v555
        %v568 = vadd.f32 %v532, %v556
        %v569 = vadd.f32 %v533, %v557
        %v570 = vld [vmem:[#allocation3 + $0x3] sm:$0xff]
        %v571 = vld [vmem:[#allocation3 + $0xb] sm:$0xff]
        %v572 = vld [vmem:[#allocation3 + $0x13] sm:$0x1]
        %v573 = vld [vmem:[#allocation3 + $0x1b] sm:$0xff]
        %v574 = vld [vmem:[#allocation3 + $0x23] sm:$0xff]
        %v575 = vld [vmem:[#allocation3 + $0x2b] sm:$0x1]
        %v576 = vld [vmem:[#allocation3 + $0x33] sm:$0xff]
        %v577 = vld [vmem:[#allocation3 + $0x3b] sm:$0xff]
        %v578 = vld [vmem:[#allocation3 + $0x43] sm:$0x1]
        %v579 = vld [vmem:[#allocation3 + $0x4b] sm:$0xff]
        %v580 = vld [vmem:[#allocation3 + $0x53] sm:$0xff]
        %v581 = vld [vmem:[#allocation3 + $0x5b] sm:$0x1]
        %v582 = vmul.f32 %v570, 0.125
        %v583 = vmul.f32 %v571, 0.125
        %v584 = vmul.f32 %v572, 0.125
        %v585 = vmul.f32 %v573, 0.125
        %v586 = vmul.f32 %v574, 0.125
        %v587 = vmul.f32 %v575, 0.125
        %v588 = vmul.f32 %v576, 0.125
        %v589 = vmul.f32 %v577, 0.125
        %v590 = vmul.f32 %v578, 0.125
        %v591 = vmul.f32 %v579, 0.125
        %v592 = vmul.f32 %v580, 0.125
        %v593 = vmul.f32 %v581, 0.125
        %v594 = vadd.f32 %v558, %v582
        %v595 = vadd.f32 %v559, %v583
        %v596 = vadd.f32 %v560, %v584
        %v597 = vadd.f32 %v561, %v585
        %v598 = vadd.f32 %v562, %v586
        %v599 = vadd.f32 %v563, %v587
        %v600 = vadd.f32 %v564, %v588
        %v601 = vadd.f32 %v565, %v589
        %v602 = vadd.f32 %v566, %v590
        %v603 = vadd.f32 %v567, %v591
        %v604 = vadd.f32 %v568, %v592
        %v605 = vadd.f32 %v569, %v593
        %606 = vst.msk [vmem:[%s168] sm:$0xff] %vm460, %v594
        %607 = vst.msk [vmem:[%s168 + $0x8] sm:$0xff] %vm460, %v595
        %vm608 = vcmask 131072
        %609 = vst.msk [vmem:[%s168 + $0x10] sm:$0x1] %vm608, %v596
        %610 = vst.msk [vmem:[%s168 + $0x18] sm:$0xff] %vm460, %v597
        %611 = vst.msk [vmem:[%s168 + $0x20] sm:$0xff] %vm460, %v598
        %612 = vst.msk [vmem:[%s168 + $0x28] sm:$0x1] %vm608, %v599
        %613 = vst.msk [vmem:[%s168 + $0x30] sm:$0xff] %vm460, %v600
        %614 = vst.msk [vmem:[%s168 + $0x38] sm:$0xff] %vm460, %v601
        %615 = vst.msk [vmem:[%s168 + $0x40] sm:$0x1] %vm608, %v602
        %616 = vst.msk [vmem:[%s168 + $0x48] sm:$0xff] %vm460, %v603
        %617 = vst.msk [vmem:[%s168 + $0x50] sm:$0xff] %vm460, %v604
        %618 = vst.msk [vmem:[%s168 + $0x58] sm:$0x1] %vm608, %v605
        %s619 = smul.u32 4, %s20
        %p620 = scmp.lt.s32.totalorder %s19, 1
        %s621 = scalar_select %p620, %s19, 1
        %p622 = scmp.lt.s32.totalorder %s619, 3
        %s623 = scalar_select %p622, %s619, 3
        %s624 = smul.addr %s623, 3
        %s625 = smul.addr %s621, 12
        %s626 = sadd.s32 %s624, %s625
        %s627 = smul.addr %s626, 8
        %s628 = scalar_lea.vmem %s1, %s627
        // Predicated region
        $region29: #{tpu_custom_call.1} parent=23 // pred_check
          %p629 = pneg %p75
        $region30: #{tpu_custom_call.1} parent=23 // pred_check_branch
          %631 = sbr.rel (%p629) target = $region32
        $region31: #{tpu_custom_call.1} parent=23 // pred_region
          %s632 = smul.u32 4, %s20
        $region32: #{tpu_custom_call.1} parent=23 // pred_fallthru
          _
      $region24: #{tpu_custom_call.1} parent=5 // pred_fallthru
        _
      %p633 = scmp.le.s32.totalorder 2, %s10
      // Predicated region
      $region33: #{tpu_custom_call.1} parent=5 // pred_check
        %p634 = pneg %p633
      $region34: #{tpu_custom_call.1} parent=5 // pred_check_branch
        %636 = sbr.rel (%p634) target = $region36
      $region35: #{tpu_custom_call.1} parent=5 // pred_region
        %s637 = ssub.s32 %s10, 2
        // Predicated region
        $region37: #{tpu_custom_call.1} parent=35 // pred_check
          %p638 = pneg %p81
        $region38: #{tpu_custom_call.1} parent=35 // pred_check_branch
          %640 = sbr.rel (%p638) target = $region40
        $region39: #{tpu_custom_call.1} parent=35 // pred_region
          %s641 = smul.u32 4, %s22
          %p642 = scmp.lt.s32.totalorder %s21, 1
          %s643 = scalar_select %p642, %s21, 1
          %p644 = scmp.lt.s32.totalorder %s641, 3
          %s645 = scalar_select %p644, %s641, 3
          %s646 = smul.addr %s645, 3
          %s647 = smul.addr %s643, 12
          %s648 = sadd.s32 %s646, %s647
          %s649 = smul.addr %s648, 8
          %s650 = scalar_lea.vmem %s1, %s649
        $region40: #{tpu_custom_call.1} parent=35 // pred_fallthru
          _
      $region36: #{tpu_custom_call.1} parent=5 // pred_fallthru
        _
    $region6: #{tpu_custom_call.1} parent=1 // loop_footer
      %s14 = sadd.s32 1, %s10
    $region7: #{tpu_custom_call.1} parent=1 // loop_footer_branch
      %9 = sbr.rel target = $region3
    $region8: #{tpu_custom_call.1} parent=1 // loop_exit
      _
    %651 = vsyncpa [#allocation5], 1
    %s652 = scalar_lea.sflag [#allocation5], 1
    %653 = vsyncpa %s652, 1

</llo_original>
